<compile_context>
chip_gen: v7x
topology: tpu7x:2x2x1
jax: 0.10.0
libtpu: 0.0.40
codegen_flags: <defaults>
</compile_context>

<pallas_src>
import functools

import jax
import jax.numpy as jnp
from jax.experimental import pallas as pl
from jax.experimental.pallas import tpu as pltpu


# ----------------------------- fused Pallas kernel -----------------------------

def _fused_attention_kernel(xT_ref, wqkv_ref, bqkv_ref, kg_ref, vg_ref,
                            wdn_ref, bdn_ref, wup_ref, bup_ref, o_ref,
                            *, k_att, d):
    """Per-batch fused kernel (grid=(B,); one batch per grid step / TensorCore).

    xT_ref:   (1, Din, N)  tokens, feature-major (token axis on lanes)
    wqkv_ref: (Din, Din)   nn.Linear weight in PyTorch (out, in) layout
    bqkv_ref: (Din, 1)     bias as a column (lane broadcast)
    kg_ref:   (1, d, k)    routed key rows as columns (precomputed in wrapper)
    vg_ref:   (1, d, k)    routed value rows as columns
    wdn/wup:  (d, 3*d)     transposed 3-tap conv weights [tap(n-1) | tap(n) | tap(n+1)]
    bdn/bup:  (d, 1)
    o_ref:    (1, d, N)    lane-dense output block
    """
    xT = xT_ref[0]                                            # (Din, N)
    n = xT.shape[1]

    # ---- qkv^T = W @ x^T + b : one MXU matmul, 108-lane output ----
    qkvT = jnp.dot(wqkv_ref[...], xT,
                   preferred_element_type=jnp.float32) + bqkv_ref[...]
    qT = qkvT[0:d, :]                                         # (d, N)
    vT = qkvT[2 * d:3 * d, :]                                 # (d, N)
    # Full key rows are not needed: the k routed rows arrive via kg_ref.

    kg = kg_ref[0]                                            # (d, k)
    vg = vg_ref[0]                                            # (d, k)

    # ---- k-way softmax attention against the routed rows (VPU/XLU/EUP only) ----
    s = []
    for j in range(k_att):
        kg_col = kg[:, j:j + 1]                               # (d, 1)
        s.append(jnp.sum(qT * kg_col, axis=0, keepdims=True))  # (1, N)
    m = s[0]
    for j in range(1, k_att):
        m = jnp.maximum(m, s[j])
    num = [jnp.exp(sj - m) for sj in s]
    denom = num[0]
    for j in range(1, k_att):
        denom = denom + num[j]
    inv = pl.reciprocal(denom, approx=True)                   # EUP slot
    attnT = num[0] * vg[:, 0:1]                               # (1,N)*(d,1) -> (d,N)
    for j in range(1, k_att):
        attnT = attnT + num[j] * vg[:, j:j + 1]
    attnT = attnT * inv                                       # (d, N)

    # ---- 3x3 Conv2d(pad=1) on the (C, 1, N) token view == 3-tap conv along tokens
    #      (lane axis), expressed as ONE K=3*d MXU matmul against the stacked taps. ----
    def conv1d_T(xt, w_ref, b_ref):
        zero = jnp.zeros((d, 1), jnp.float32)
        xp = jnp.concatenate([zero, xt, zero], axis=1)        # (d, N+2), zero padded
        x_prev = xp[:, 0:n]                                   # token n-1
        x_next = xp[:, 2:n + 2]                               # token n+1
        x_cat = jnp.concatenate([x_prev, xt, x_next], axis=0)  # (3d, N)
        return jnp.dot(w_ref[...], x_cat,
                       preferred_element_type=jnp.float32) + b_ref[...]

    mid = attnT + conv1d_T(vT, wdn_ref, bdn_ref)              # downsample_conv residual
    outT = conv1d_T(mid, wup_ref, bup_ref)                    # upsample_conv
    o_ref[0] = outT.astype(o_ref.dtype)


# ------------------------------ forward pass ------------------------------

def attention_forward(params, x_img, *, input_dim, num_regions, num_attended_regions):
    S = num_regions
    k = num_attended_regions
    p = input_dim // S                     # patch_size
    B, C, H, W = x_img.shape
    d = input_dim // 3                     # torch.chunk(3, dim=-1) size

    # ---- F.unfold(input, p, stride=p): (B, C*p*p, L), channel-major patch flattening ----
    Lh, Lw = H // p, W // p
    xr = x_img.reshape(B, C, Lh, p, Lw, p)
    xr = jnp.transpose(xr, (0, 1, 3, 5, 2, 4))            # (B, C, p, p, Lh, Lw)
    x_unf = xr.reshape(B, C * p * p, Lh * Lw)

    # ---- view / permute / view exactly as the source (row-major reshapes) ----
    x1 = x_unf.reshape(B, S * S, -1, p * p)
    x1 = jnp.transpose(x1, (0, 2, 1, 3))
    x1 = x1.reshape(B, -1, S * S)                         # (B, N, input_dim)
    N = x1.shape[1]

    w_qkv = params["w_qkv"]
    b_qkv = params["b_qkv"]

    # ---- region routing hoisted to the wrapper (exact: mean commutes with Linear) ----
    x_mean = jnp.mean(x1, axis=1)                         # (B, Din)
    qkv_mean = x_mean @ w_qkv.T + b_qkv                   # (B, Din)
    q_r = qkv_mean[:, :d]
    k_r = qkv_mean[:, d:2 * d]
    a_r = q_r @ k_r.T                                     # (B, B)
    _, top_idx = jax.lax.top_k(a_r, k)                    # (B, k) int32

    # TODO(synk): source gathers with a hard-coded expand(1, 2, 2) that is shape-
    # inconsistent with the following matmul (module unrunnable as written); we
    # implement the consistent per-batch token-row gather.  The routed rows'
    # key/value projections are computed here (identical per-token linear map),
    # so the kernel needs no in-kernel gather at all.
    x_g = jnp.take_along_axis(x1, top_idx[:, :, None], axis=1)   # (B, k, Din)
    qkv_g = x_g @ w_qkv.T + b_qkv                                # (B, k, Din)
    kg_cols = jnp.transpose(qkv_g[..., d:2 * d], (0, 2, 1))      # (B, d, k)
    vg_cols = jnp.transpose(qkv_g[..., 2 * d:], (0, 2, 1))       # (B, d, k)

    # ---- feature-major (lane-dense) kernel input / parameter prep ----
    xT = jnp.transpose(x1, (0, 2, 1))                     # (B, Din, N)
    b_qkv_col = b_qkv.reshape(input_dim, 1)

    # TODO(synk): source applies Conv2d(input_dim, input_dim) to 3-D tensors whose
    # channel count is d = input_dim // 3; implemented as the same 3x3/pad-1 conv on
    # the (B, d, 1, N) view using the [:d, :d] slice of the declared parameters
    # (only the middle kernel row touches real data when H == 1).
    def conv_taps_T(w_conv, bias, c):
        w_mid = jnp.transpose(w_conv[:c, :c, 1, :], (0, 2, 1))   # (Cout, kw, Cin)
        return w_mid.reshape(c, 3 * c), bias[:c].reshape(c, 1)

    w_dn, b_dn = conv_taps_T(params["w_down"], params["b_down"], d)
    w_up, b_up = conv_taps_T(params["w_up"], params["b_up"], d)

    kernel = functools.partial(_fused_attention_kernel, k_att=k, d=d)
    outT = pl.pallas_call(
        kernel,
        out_shape=jax.ShapeDtypeStruct((B, d, N), x1.dtype),
        grid=(B,),
        in_specs=[
            pl.BlockSpec((1, input_dim, N), lambda b: (b, 0, 0)),
            pl.BlockSpec((input_dim, input_dim), lambda b: (0, 0)),
            pl.BlockSpec((input_dim, 1), lambda b: (0, 0)),
            pl.BlockSpec((1, d, k), lambda b: (b, 0, 0)),
            pl.BlockSpec((1, d, k), lambda b: (b, 0, 0)),
            pl.BlockSpec((d, 3 * d), lambda b: (0, 0)),
            pl.BlockSpec((d, 1), lambda b: (0, 0)),
            pl.BlockSpec((d, 3 * d), lambda b: (0, 0)),
            pl.BlockSpec((d, 1), lambda b: (0, 0)),
        ],
        out_specs=pl.BlockSpec((1, d, N), lambda b: (b, 0, 0)),
        compiler_params=pltpu.CompilerParams(
            dimension_semantics=("parallel",)),
    )(xT, w_qkv, b_qkv_col, kg_cols, vg_cols, w_dn, b_dn, w_up, b_up)

    # TODO(synk): source print(I_r)/print(key) side effects omitted.

    out = jnp.transpose(outT, (0, 2, 1))                  # (B, N, d), undo lane-dense layout

    # ---- fold back exactly as the source views/permutes ----
    output = out.reshape(B, -1, S * S, p * p)
    output = jnp.transpose(output, (0, 2, 1, 3))
    output = output.reshape(B, -1, S * p, S * p)
    return output


# ---------------------------------- main ----------------------------------

if __name__ == "__main__":
    # Constraints implied by the forward pass: input_dim == num_regions**2,
    # input_dim % 3 == 0 (chunk(3)), spatial == num_regions * patch_size == input_dim,
    # channels % 3 == 0 so the final fold is well defined.
    input_dim = 36
    num_regions = 6
    num_attended_regions = 2
    B, C = 2, 3
    H = W = input_dim

    key = jax.random.PRNGKey(0)
    kx, k1, k2, k3, k4, k5, k6, k7, k8 = jax.random.split(key, 9)
    x = jax.random.normal(kx, (B, C, H, W), jnp.float32)

    # Parameter shapes exactly as in the module's __init__ (deterministic init).
    params = {
        "w_qkv": 0.1 * jax.random.normal(k1, (input_dim, input_dim), jnp.float32),
        "b_qkv": 0.1 * jax.random.normal(k2, (input_dim,), jnp.float32),
        # token_to_token_attention is declared but unused in forward (kept for fidelity)
        "w_t2t": 0.1 * jax.random.normal(k3, (input_dim, input_dim), jnp.float32),
        "b_t2t": 0.1 * jax.random.normal(k4, (input_dim,), jnp.float32),
        "w_down": 0.1 * jax.random.normal(k5, (input_dim, input_dim, 3, 3), jnp.float32),
        "b_down": 0.1 * jax.random.normal(k6, (input_dim,), jnp.float32),
        "w_up": 0.1 * jax.random.normal(k7, (input_dim, input_dim, 3, 3), jnp.float32),
        "b_up": 0.1 * jax.random.normal(k8, (input_dim,), jnp.float32),
    }

    fwd = jax.jit(functools.partial(
        attention_forward,
        input_dim=input_dim,
        num_regions=num_regions,
        num_attended_regions=num_attended_regions))

    out = fwd(params, x)
    jax.block_until_ready(out)

    patch = input_dim // num_regions
    c_out = (C * (input_dim // 3)) // input_dim
    assert out.shape == (B, c_out, num_regions * patch, num_regions * patch), out.shape
    assert bool(jnp.all(jnp.isfinite(out)))
    print("KERNEL_OK")
</pallas_src>

<mosaic_0001>
module attributes {stable_mosaic.version = 11 : i64} {
  func.func @_fused_attention_kernel(%arg0: i32, %arg1: memref<1x36x108xf32, #tpu.memory_space<vmem>>, %arg2: memref<36x36xf32, #tpu.memory_space<vmem>>, %arg3: memref<36x1xf32, #tpu.memory_space<vmem>>, %arg4: memref<1x12x2xf32, #tpu.memory_space<vmem>>, %arg5: memref<1x12x2xf32, #tpu.memory_space<vmem>>, %arg6: memref<12x36xf32, #tpu.memory_space<vmem>>, %arg7: memref<12x1xf32, #tpu.memory_space<vmem>>, %arg8: memref<12x36xf32, #tpu.memory_space<vmem>>, %arg9: memref<12x1xf32, #tpu.memory_space<vmem>>, %arg10: memref<1x12x108xf32, #tpu.memory_space<vmem>>) attributes {dimension_semantics = [#tpu.dimension_semantics<parallel>], iteration_bounds = array<i64: 2>, scalar_prefetch = 0 : i64, scratch_operands = 0 : i64, tpu.core_type = #tpu.core_type<tc>, window_params = [{transform_indices = @transform_0, window_bounds = array<i64: 1, 36, 108>}, {pipeline_mode = #tpu.pipeline_mode<synchronous>, transform_indices = @transform_1, window_bounds = array<i64: 36, 36>}, {pipeline_mode = #tpu.pipeline_mode<synchronous>, transform_indices = @transform_2, window_bounds = array<i64: 36, 1>}, {transform_indices = @transform_3, window_bounds = array<i64: 1, 12, 2>}, {transform_indices = @transform_4, window_bounds = array<i64: 1, 12, 2>}, {pipeline_mode = #tpu.pipeline_mode<synchronous>, transform_indices = @transform_5, window_bounds = array<i64: 12, 36>}, {pipeline_mode = #tpu.pipeline_mode<synchronous>, transform_indices = @transform_6, window_bounds = array<i64: 12, 1>}, {pipeline_mode = #tpu.pipeline_mode<synchronous>, transform_indices = @transform_7, window_bounds = array<i64: 12, 36>}, {pipeline_mode = #tpu.pipeline_mode<synchronous>, transform_indices = @transform_8, window_bounds = array<i64: 12, 1>}, {transform_indices = @transform_9, window_bounds = array<i64: 1, 12, 108>}]} {
    %c0 = arith.constant 0 : index
    %c0_0 = arith.constant 0 : index
    %c0_1 = arith.constant 0 : index
    %0 = vector.load %arg1[%c0, %c0_0, %c0_1] : memref<1x36x108xf32, #tpu.memory_space<vmem>>, vector<1x36x108xf32>
    %1 = vector.shape_cast %0 : vector<1x36x108xf32> to vector<36x108xf32>
    %c0_2 = arith.constant 0 : index
    %c0_3 = arith.constant 0 : index
    %2 = vector.load %arg2[%c0_2, %c0_3] : memref<36x36xf32, #tpu.memory_space<vmem>>, vector<36x36xf32>
    %cst = arith.constant dense<0.000000e+00> : vector<36x108xf32>
    %3 = tpu.matmul %2, %1, %cst {dimension_numbers = #tpu.dot_dimension_numbers<[1], [0], [0], [1], [0, 0, 1, 1], [], []>} : vector<36x36xf32>, vector<36x108xf32>, vector<36x108xf32> -> vector<36x108xf32>
    %c0_4 = arith.constant 0 : index
    %c0_5 = arith.constant 0 : index
    %4 = vector.load %arg3[%c0_4, %c0_5] : memref<36x1xf32, #tpu.memory_space<vmem>>, vector<36x1xf32>
    %5 = vector.broadcast %4 : vector<36x1xf32> to vector<36x108xf32>
    %6 = arith.addf %3, %5 : vector<36x108xf32>
    %7 = vector.extract_strided_slice %6 {offsets = [0, 0], sizes = [12, 108], strides = [1, 1]} : vector<36x108xf32> to vector<12x108xf32>
    %8 = vector.extract_strided_slice %6 {offsets = [24, 0], sizes = [12, 108], strides = [1, 1]} : vector<36x108xf32> to vector<12x108xf32>
    %c0_6 = arith.constant 0 : index
    %c0_7 = arith.constant 0 : index
    %c0_8 = arith.constant 0 : index
    %9 = vector.load %arg4[%c0_6, %c0_7, %c0_8] : memref<1x12x2xf32, #tpu.memory_space<vmem>>, vector<1x12x2xf32>
    %10 = vector.shape_cast %9 : vector<1x12x2xf32> to vector<12x2xf32>
    %c0_9 = arith.constant 0 : index
    %c0_10 = arith.constant 0 : index
    %c0_11 = arith.constant 0 : index
    %11 = vector.load %arg5[%c0_9, %c0_10, %c0_11] : memref<1x12x2xf32, #tpu.memory_space<vmem>>, vector<1x12x2xf32>
    %12 = vector.shape_cast %11 : vector<1x12x2xf32> to vector<12x2xf32>
    %13 = vector.extract_strided_slice %10 {offsets = [0, 0], sizes = [12, 1], strides = [1, 1]} : vector<12x2xf32> to vector<12x1xf32>
    %14 = vector.broadcast %13 : vector<12x1xf32> to vector<12x108xf32>
    %15 = arith.mulf %7, %14 : vector<12x108xf32>
    %cst_12 = arith.constant dense<0.000000e+00> : vector<108xf32>
    %16 = vector.multi_reduction <add>, %15, %cst_12 [0] : vector<12x108xf32> to vector<108xf32>
    %17 = vector.shape_cast %16 : vector<108xf32> to vector<1x108xf32>
    %18 = vector.extract_strided_slice %10 {offsets = [0, 1], sizes = [12, 1], strides = [1, 1]} : vector<12x2xf32> to vector<12x1xf32>
    %19 = vector.broadcast %18 : vector<12x1xf32> to vector<12x108xf32>
    %20 = arith.mulf %7, %19 : vector<12x108xf32>
    %cst_13 = arith.constant dense<0.000000e+00> : vector<108xf32>
    %21 = vector.multi_reduction <add>, %20, %cst_13 [0] : vector<12x108xf32> to vector<108xf32>
    %22 = vector.shape_cast %21 : vector<108xf32> to vector<1x108xf32>
    %23 = arith.maximumf %17, %22 : vector<1x108xf32>
    %24 = arith.subf %17, %23 : vector<1x108xf32>
    %25 = math.exp %24 : vector<1x108xf32>
    %26 = arith.subf %22, %23 : vector<1x108xf32>
    %27 = math.exp %26 : vector<1x108xf32>
    %28 = arith.addf %25, %27 : vector<1x108xf32>
    %29 = tpu.reciprocal %28 {approx = true} : vector<1x108xf32> -> vector<1x108xf32>
    %30 = vector.extract_strided_slice %12 {offsets = [0, 0], sizes = [12, 1], strides = [1, 1]} : vector<12x2xf32> to vector<12x1xf32>
    %31 = vector.broadcast %25 : vector<1x108xf32> to vector<12x108xf32>
    %32 = vector.broadcast %30 : vector<12x1xf32> to vector<12x108xf32>
    %33 = arith.mulf %31, %32 : vector<12x108xf32>
    %34 = vector.extract_strided_slice %12 {offsets = [0, 1], sizes = [12, 1], strides = [1, 1]} : vector<12x2xf32> to vector<12x1xf32>
    %35 = vector.broadcast %27 : vector<1x108xf32> to vector<12x108xf32>
    %36 = vector.broadcast %34 : vector<12x1xf32> to vector<12x108xf32>
    %37 = arith.mulf %35, %36 : vector<12x108xf32>
    %38 = arith.addf %33, %37 : vector<12x108xf32>
    %39 = vector.broadcast %29 : vector<1x108xf32> to vector<12x108xf32>
    %40 = arith.mulf %38, %39 : vector<12x108xf32>
    %cst_14 = arith.constant 0.000000e+00 : f32
    %41 = vector.broadcast %cst_14 : f32 to vector<12x1xf32>
    %42 = tpu.concatenate %41, %8, %41 in 1 : vector<12x1xf32>, vector<12x108xf32>, vector<12x1xf32> -> vector<12x110xf32>
    %43 = vector.extract_strided_slice %42 {offsets = [0, 0], sizes = [12, 108], strides = [1, 1]} : vector<12x110xf32> to vector<12x108xf32>
    %44 = vector.extract_strided_slice %42 {offsets = [0, 2], sizes = [12, 108], strides = [1, 1]} : vector<12x110xf32> to vector<12x108xf32>
    %45 = tpu.concatenate %43, %8, %44 in 0 : vector<12x108xf32>, vector<12x108xf32>, vector<12x108xf32> -> vector<36x108xf32>
    %c0_15 = arith.constant 0 : index
    %c0_16 = arith.constant 0 : index
    %46 = vector.load %arg6[%c0_15, %c0_16] : memref<12x36xf32, #tpu.memory_space<vmem>>, vector<12x36xf32>
    %cst_17 = arith.constant dense<0.000000e+00> : vector<12x108xf32>
    %47 = tpu.matmul %46, %45, %cst_17 {dimension_numbers = #tpu.dot_dimension_numbers<[1], [0], [0], [1], [0, 0, 1, 1], [], []>} : vector<12x36xf32>, vector<36x108xf32>, vector<12x108xf32> -> vector<12x108xf32>
    %c0_18 = arith.constant 0 : index
    %c0_19 = arith.constant 0 : index
    %48 = vector.load %arg7[%c0_18, %c0_19] : memref<12x1xf32, #tpu.memory_space<vmem>>, vector<12x1xf32>
    %49 = vector.broadcast %48 : vector<12x1xf32> to vector<12x108xf32>
    %50 = arith.addf %47, %49 : vector<12x108xf32>
    %51 = arith.addf %40, %50 : vector<12x108xf32>
    %cst_20 = arith.constant 0.000000e+00 : f32
    %52 = vector.broadcast %cst_20 : f32 to vector<12x1xf32>
    %53 = tpu.concatenate %52, %51, %52 in 1 : vector<12x1xf32>, vector<12x108xf32>, vector<12x1xf32> -> vector<12x110xf32>
    %54 = vector.extract_strided_slice %53 {offsets = [0, 0], sizes = [12, 108], strides = [1, 1]} : vector<12x110xf32> to vector<12x108xf32>
    %55 = vector.extract_strided_slice %53 {offsets = [0, 2], sizes = [12, 108], strides = [1, 1]} : vector<12x110xf32> to vector<12x108xf32>
    %56 = tpu.concatenate %54, %51, %55 in 0 : vector<12x108xf32>, vector<12x108xf32>, vector<12x108xf32> -> vector<36x108xf32>
    %c0_21 = arith.constant 0 : index
    %c0_22 = arith.constant 0 : index
    %57 = vector.load %arg8[%c0_21, %c0_22] : memref<12x36xf32, #tpu.memory_space<vmem>>, vector<12x36xf32>
    %cst_23 = arith.constant dense<0.000000e+00> : vector<12x108xf32>
    %58 = tpu.matmul %57, %56, %cst_23 {dimension_numbers = #tpu.dot_dimension_numbers<[1], [0], [0], [1], [0, 0, 1, 1], [], []>} : vector<12x36xf32>, vector<36x108xf32>, vector<12x108xf32> -> vector<12x108xf32>
    %c0_24 = arith.constant 0 : index
    %c0_25 = arith.constant 0 : index
    %59 = vector.load %arg9[%c0_24, %c0_25] : memref<12x1xf32, #tpu.memory_space<vmem>>, vector<12x1xf32>
    %60 = vector.broadcast %59 : vector<12x1xf32> to vector<12x108xf32>
    %61 = arith.addf %58, %60 : vector<12x108xf32>
    %c0_26 = arith.constant 0 : index
    %c0_27 = arith.constant 0 : index
    %c0_28 = arith.constant 0 : index
    %62 = vector.load %arg10[%c0_26, %c0_27, %c0_28] : memref<1x12x108xf32, #tpu.memory_space<vmem>>, vector<1x12x108xf32>
    %63 = vector.shape_cast %62 : vector<1x12x108xf32> to vector<12x108xf32>
    %64 = vector.shape_cast %61 : vector<12x108xf32> to vector<1x12x108xf32>
    tpu.vector_store %arg10[%c0_26, %c0_27, %c0_28], %64 {strides = array<i32>} : memref<1x12x108xf32, #tpu.memory_space<vmem>>, vector<1x12x108xf32>,
    return
  }
  func.func @transform_0(%arg0: i32) -> (i32, i32, i32) {
    %c0_i32 = arith.constant 0 : i32
    %c0_i32_0 = arith.constant 0 : i32
    %c0_i32_1 = arith.constant 0 : i32
    return %arg0, %c0_i32, %c0_i32_0 : i32, i32, i32
  }
  func.func @transform_1(%arg0: i32) -> (i32, i32) {
    %c0_i32 = arith.constant 0 : i32
    %c0_i32_0 = arith.constant 0 : i32
    %c0_i32_1 = arith.constant 0 : i32
    return %c0_i32, %c0_i32_0 : i32, i32
  }
  func.func @transform_2(%arg0: i32) -> (i32, i32) {
    %c0_i32 = arith.constant 0 : i32
    %c0_i32_0 = arith.constant 0 : i32
    %c0_i32_1 = arith.constant 0 : i32
    return %c0_i32, %c0_i32_0 : i32, i32
  }
  func.func @transform_3(%arg0: i32) -> (i32, i32, i32) {
    %c0_i32 = arith.constant 0 : i32
    %c0_i32_0 = arith.constant 0 : i32
    %c0_i32_1 = arith.constant 0 : i32
    return %arg0, %c0_i32, %c0_i32_0 : i32, i32, i32
  }
  func.func @transform_4(%arg0: i32) -> (i32, i32, i32) {
    %c0_i32 = arith.constant 0 : i32
    %c0_i32_0 = arith.constant 0 : i32
    %c0_i32_1 = arith.constant 0 : i32
    return %arg0, %c0_i32, %c0_i32_0 : i32, i32, i32
  }
  func.func @transform_5(%arg0: i32) -> (i32, i32) {
    %c0_i32 = arith.constant 0 : i32
    %c0_i32_0 = arith.constant 0 : i32
    %c0_i32_1 = arith.constant 0 : i32
    return %c0_i32, %c0_i32_0 : i32, i32
  }
  func.func @transform_6(%arg0: i32) -> (i32, i32) {
    %c0_i32 = arith.constant 0 : i32
    %c0_i32_0 = arith.constant 0 : i32
    %c0_i32_1 = arith.constant 0 : i32
    return %c0_i32, %c0_i32_0 : i32, i32
  }
  func.func @transform_7(%arg0: i32) -> (i32, i32) {
    %c0_i32 = arith.constant 0 : i32
    %c0_i32_0 = arith.constant 0 : i32
    %c0_i32_1 = arith.constant 0 : i32
    return %c0_i32, %c0_i32_0 : i32, i32
  }
  func.func @transform_8(%arg0: i32) -> (i32, i32) {
    %c0_i32 = arith.constant 0 : i32
    %c0_i32_0 = arith.constant 0 : i32
    %c0_i32_1 = arith.constant 0 : i32
    return %c0_i32, %c0_i32_0 : i32, i32
  }
  func.func @transform_9(%arg0: i32) -> (i32, i32, i32) {
    %c0_i32 = arith.constant 0 : i32
    %c0_i32_0 = arith.constant 0 : i32
    %c0_i32_1 = arith.constant 0 : i32
    return %arg0, %c0_i32, %c0_i32_0 : i32, i32, i32
  }
}

</mosaic_0001>

<llo_original>
// kernel: attention_forward.1
$region0: #{attention_forward.1}
  #allocation0 [shape = 'u32[]', space=smem, size = 0x4, offset = 0x4, fixed_abs, tag = 'smem constant byte address 0x4 - core index']
  #allocation1 [shape = 'u32[144,128]{1,0:T(1,128)}', space=vmem, size = 0x12000, scoped, tag = 'internal scratch']
  %s0 = inlined_call_operand.vmem [shape: f32[2,36,108], index: 0, kind: input, shape index: {}]
  %s1 = inlined_call_operand.vmem [shape: f32[36,36], index: 1, kind: input, shape index: {}]
  %s2 = inlined_call_operand.vmem [shape: f32[36,1], index: 2, kind: input, shape index: {}]
  %s3 = inlined_call_operand.vmem [shape: f32[2,12,2], index: 3, kind: input, shape index: {}]
  %s4 = inlined_call_operand.vmem [shape: f32[2,12,2], index: 4, kind: input, shape index: {}]
  %s5 = inlined_call_operand.vmem [shape: f32[12,36], index: 5, kind: input, shape index: {}]
  %s6 = inlined_call_operand.vmem [shape: f32[12,1], index: 6, kind: input, shape index: {}]
  %s7 = inlined_call_operand.vmem [shape: f32[12,36], index: 7, kind: input, shape index: {}]
  %s8 = inlined_call_operand.vmem [shape: f32[12,1], index: 8, kind: input, shape index: {}]
  %s9 = inlined_call_operand.vmem [shape: f32[2,12,108], index: 9, kind: output, shape index: {}]
  %s10 = sld [smem:[#allocation0]]
  $region69: #{attention_forward.1} parent=0
    _
  %s12 = ssub.s32 1, %s10
  %s13 = scalar_select 0, %s12, %s10
  loop: start=0, step=1, limit=4
  $region2: #{attention_forward.1} parent=0 // loop_pre_header
    _
  $region3: #{attention_forward.1} parent=0 // loop_header
    %s15 = sphi 0, %s19
    %p16 = scmp.ge.s32.totalorder %s15, 4
    %s25 = sphi 0, %s27
    %s28 = sphi 0, %s25
    %s29 = sphi 0, %s28
    %s45 = sphi 0, %s29
    %s49 = sphi 0, %s49
    %s51 = sphi 0, %s49
    %s52 = sphi 0, %s51
    %s66 = sphi 0, %s52
    %s70 = sphi 0, %s70
    %s72 = sphi 0, %s70
    %s73 = sphi 0, %s72
    %s87 = sphi 0, %s73
    %s93 = sphi 0, %s95
    %s96 = sphi 0, %s93
    %s97 = sphi 0, %s96
    %s113 = sphi 0, %s97
    %s119 = sphi 0, %s121
    %s122 = sphi 0, %s119
    %s123 = sphi 0, %s122
    %s139 = sphi 0, %s123
    %s143 = sphi 0, %s143
    %s145 = sphi 0, %s143
    %s146 = sphi 0, %s145
    %s160 = sphi 0, %s146
    %s164 = sphi 0, %s164
    %s166 = sphi 0, %s164
    %s167 = sphi 0, %s166
    %s181 = sphi 0, %s167
    %s185 = sphi 0, %s185
    %s187 = sphi 0, %s185
    %s188 = sphi 0, %s187
    %s202 = sphi 0, %s188
    %s206 = sphi 0, %s206
    %s208 = sphi 0, %s206
    %s209 = sphi 0, %s208
    %s223 = sphi 0, %s209
    %s229 = sphi 0, %s231
    %s232 = sphi 0, %s229
    %s233 = sphi 0, %s232
    %s249 = sphi 0, %s233
  $region4: #{attention_forward.1} parent=0 // loop_header_branch
    %18 = sbr.rel (%p16) target = $region8
  $region5: #{attention_forward.1} parent=0 // loop_body
    %s20 = ssub.s32 %s15, 1
    %s21 = ssub.s32 %s15, 2
    %s22 = sadd.s32 %s15, 1
    %s23 = ssub.s32 %s15, %s22
    %p24 = scmp.eq.s32.totalorder %s23, 0
    %s26 = sadd.s32 %s25, 1
    %s27 = scalar_select %p24, %s25, %s26
    %p30 = pneg %p24
    %p31 = scmp.eq.s32.totalorder %s15, 1
    %p32 = por %p30, %p31
    %p33 = scmp.ne.s32.totalorder %s25, %s28
    %p34 = scmp.eq.s32.totalorder %s15, 0
    %p35 = por %p33, %p34
    %p36 = scmp.ne.s32.totalorder %s25, %s28
    %p37 = scmp.eq.s32.totalorder %s20, 1
    %p38 = por %p36, %p37
    %p39 = scmp.ne.s32.totalorder %s28, %s29
    %p40 = scmp.eq.s32.totalorder %s20, 0
    %p41 = por %p39, %p40
    %p42 = scmp.ne.s32.totalorder %s28, %s29
    %p43 = scmp.eq.s32.totalorder %s21, 1
    %p44 = por %p42, %p43
    %p46 = scmp.ne.s32.totalorder %s29, %s45
    %p47 = scmp.eq.s32.totalorder %s21, 0
    %p48 = por %p46, %p47
    %s50 = sadd.s32 %s49, 1
    %p53 = scmp.eq.s32.totalorder %s15, 1
    %p54 = scmp.ne.s32.totalorder %s49, %s51
    %p55 = scmp.eq.s32.totalorder %s15, 0
    %p56 = por %p54, %p55
    %p57 = scmp.ne.s32.totalorder %s49, %s51
    %p58 = scmp.eq.s32.totalorder %s20, 1
    %p59 = por %p57, %p58
    %p60 = scmp.ne.s32.totalorder %s51, %s52
    %p61 = scmp.eq.s32.totalorder %s20, 0
    %p62 = por %p60, %p61
    %p63 = scmp.ne.s32.totalorder %s51, %s52
    %p64 = scmp.eq.s32.totalorder %s21, 1
    %p65 = por %p63, %p64
    %p67 = scmp.ne.s32.totalorder %s52, %s66
    %p68 = scmp.eq.s32.totalorder %s21, 0
    %p69 = por %p67, %p68
    %s71 = sadd.s32 %s70, 1
    %p74 = scmp.eq.s32.totalorder %s15, 1
    %p75 = scmp.ne.s32.totalorder %s70, %s72
    %p76 = scmp.eq.s32.totalorder %s15, 0
    %p77 = por %p75, %p76
    %p78 = scmp.ne.s32.totalorder %s70, %s72
    %p79 = scmp.eq.s32.totalorder %s20, 1
    %p80 = por %p78, %p79
    %p81 = scmp.ne.s32.totalorder %s72, %s73
    %p82 = scmp.eq.s32.totalorder %s20, 0
    %p83 = por %p81, %p82
    %p84 = scmp.ne.s32.totalorder %s72, %s73
    %p85 = scmp.eq.s32.totalorder %s21, 1
    %p86 = por %p84, %p85
    %p88 = scmp.ne.s32.totalorder %s73, %s87
    %p89 = scmp.eq.s32.totalorder %s21, 0
    %p90 = por %p88, %p89
    %s91 = ssub.s32 %s15, %s22
    %p92 = scmp.eq.s32.totalorder %s91, 0
    %s94 = sadd.s32 %s93, 1
    %s95 = scalar_select %p92, %s93, %s94
    %p98 = pneg %p92
    %p99 = scmp.eq.s32.totalorder %s15, 1
    %p100 = por %p98, %p99
    %p101 = scmp.ne.s32.totalorder %s93, %s96
    %p102 = scmp.eq.s32.totalorder %s15, 0
    %p103 = por %p101, %p102
    %p104 = scmp.ne.s32.totalorder %s93, %s96
    %p105 = scmp.eq.s32.totalorder %s20, 1
    %p106 = por %p104, %p105
    %p107 = scmp.ne.s32.totalorder %s96, %s97
    %p108 = scmp.eq.s32.totalorder %s20, 0
    %p109 = por %p107, %p108
    %p110 = scmp.ne.s32.totalorder %s96, %s97
    %p111 = scmp.eq.s32.totalorder %s21, 1
    %p112 = por %p110, %p111
    %p114 = scmp.ne.s32.totalorder %s97, %s113
    %p115 = scmp.eq.s32.totalorder %s21, 0
    %p116 = por %p114, %p115
    %s117 = ssub.s32 %s15, %s22
    %p118 = scmp.eq.s32.totalorder %s117, 0
    %s120 = sadd.s32 %s119, 1
    %s121 = scalar_select %p118, %s119, %s120
    %p124 = pneg %p118
    %p125 = scmp.eq.s32.totalorder %s15, 1
    %p126 = por %p124, %p125
    %p127 = scmp.ne.s32.totalorder %s119, %s122
    %p128 = scmp.eq.s32.totalorder %s15, 0
    %p129 = por %p127, %p128
    %p130 = scmp.ne.s32.totalorder %s119, %s122
    %p131 = scmp.eq.s32.totalorder %s20, 1
    %p132 = por %p130, %p131
    %p133 = scmp.ne.s32.totalorder %s122, %s123
    %p134 = scmp.eq.s32.totalorder %s20, 0
    %p135 = por %p133, %p134
    %p136 = scmp.ne.s32.totalorder %s122, %s123
    %p137 = scmp.eq.s32.totalorder %s21, 1
    %p138 = por %p136, %p137
    %p140 = scmp.ne.s32.totalorder %s123, %s139
    %p141 = scmp.eq.s32.totalorder %s21, 0
    %p142 = por %p140, %p141
    %s144 = sadd.s32 %s143, 1
    %p147 = scmp.eq.s32.totalorder %s15, 1
    %p148 = scmp.ne.s32.totalorder %s143, %s145
    %p149 = scmp.eq.s32.totalorder %s15, 0
    %p150 = por %p148, %p149
    %p151 = scmp.ne.s32.totalorder %s143, %s145
    %p152 = scmp.eq.s32.totalorder %s20, 1
    %p153 = por %p151, %p152
    %p154 = scmp.ne.s32.totalorder %s145, %s146
    %p155 = scmp.eq.s32.totalorder %s20, 0
    %p156 = por %p154, %p155
    %p157 = scmp.ne.s32.totalorder %s145, %s146
    %p158 = scmp.eq.s32.totalorder %s21, 1
    %p159 = por %p157, %p158
    %p161 = scmp.ne.s32.totalorder %s146, %s160
    %p162 = scmp.eq.s32.totalorder %s21, 0
    %p163 = por %p161, %p162
    %s165 = sadd.s32 %s164, 1
    %p168 = scmp.eq.s32.totalorder %s15, 1
    %p169 = scmp.ne.s32.totalorder %s164, %s166
    %p170 = scmp.eq.s32.totalorder %s15, 0
    %p171 = por %p169, %p170
    %p172 = scmp.ne.s32.totalorder %s164, %s166
    %p173 = scmp.eq.s32.totalorder %s20, 1
    %p174 = por %p172, %p173
    %p175 = scmp.ne.s32.totalorder %s166, %s167
    %p176 = scmp.eq.s32.totalorder %s20, 0
    %p177 = por %p175, %p176
    %p178 = scmp.ne.s32.totalorder %s166, %s167
    %p179 = scmp.eq.s32.totalorder %s21, 1
    %p180 = por %p178, %p179
    %p182 = scmp.ne.s32.totalorder %s167, %s181
    %p183 = scmp.eq.s32.totalorder %s21, 0
    %p184 = por %p182, %p183
    %s186 = sadd.s32 %s185, 1
    %p189 = scmp.eq.s32.totalorder %s15, 1
    %p190 = scmp.ne.s32.totalorder %s185, %s187
    %p191 = scmp.eq.s32.totalorder %s15, 0
    %p192 = por %p190, %p191
    %p193 = scmp.ne.s32.totalorder %s185, %s187
    %p194 = scmp.eq.s32.totalorder %s20, 1
    %p195 = por %p193, %p194
    %p196 = scmp.ne.s32.totalorder %s187, %s188
    %p197 = scmp.eq.s32.totalorder %s20, 0
    %p198 = por %p196, %p197
    %p199 = scmp.ne.s32.totalorder %s187, %s188
    %p200 = scmp.eq.s32.totalorder %s21, 1
    %p201 = por %p199, %p200
    %p203 = scmp.ne.s32.totalorder %s188, %s202
    %p204 = scmp.eq.s32.totalorder %s21, 0
    %p205 = por %p203, %p204
    %s207 = sadd.s32 %s206, 1
    %p210 = scmp.eq.s32.totalorder %s15, 1
    %p211 = scmp.ne.s32.totalorder %s206, %s208
    %p212 = scmp.eq.s32.totalorder %s15, 0
    %p213 = por %p211, %p212
    %p214 = scmp.ne.s32.totalorder %s206, %s208
    %p215 = scmp.eq.s32.totalorder %s20, 1
    %p216 = por %p214, %p215
    %p217 = scmp.ne.s32.totalorder %s208, %s209
    %p218 = scmp.eq.s32.totalorder %s20, 0
    %p219 = por %p217, %p218
    %p220 = scmp.ne.s32.totalorder %s208, %s209
    %p221 = scmp.eq.s32.totalorder %s21, 1
    %p222 = por %p220, %p221
    %p224 = scmp.ne.s32.totalorder %s209, %s223
    %p225 = scmp.eq.s32.totalorder %s21, 0
    %p226 = por %p224, %p225
    %s227 = ssub.s32 %s15, %s22
    %p228 = scmp.eq.s32.totalorder %s227, 0
    %s230 = sadd.s32 %s229, 1
    %s231 = scalar_select %p228, %s229, %s230
    %p234 = pneg %p228
    %p235 = scmp.eq.s32.totalorder %s15, 1
    %p236 = por %p234, %p235
    %p237 = scmp.ne.s32.totalorder %s229, %s232
    %p238 = scmp.eq.s32.totalorder %s15, 0
    %p239 = por %p237, %p238
    %p240 = scmp.ne.s32.totalorder %s229, %s232
    %p241 = scmp.eq.s32.totalorder %s20, 1
    %p242 = por %p240, %p241
    %p243 = scmp.ne.s32.totalorder %s232, %s233
    %p244 = scmp.eq.s32.totalorder %s20, 0
    %p245 = por %p243, %p244
    %p246 = scmp.ne.s32.totalorder %s232, %s233
    %p247 = scmp.eq.s32.totalorder %s21, 1
    %p248 = por %p246, %p247
    %p250 = scmp.ne.s32.totalorder %s233, %s249
    %p251 = scmp.eq.s32.totalorder %s21, 0
    %p252 = por %p250, %p251
    %p253 = scmp.le.s32.totalorder 1, %s15
    %p254 = scmp.lt.s32.totalorder %s15, 3
    %p255 = pnand %p253, %p254
    %p256 = pneg %p255
    // Predicated region
    $region9: #{attention_forward.1} parent=5 // pred_check
      _
    $region10: #{attention_forward.1} parent=5 // pred_check_branch
      %258 = sbr.rel (%p255) target = $region12
    $region11: #{attention_forward.1} parent=5 // pred_region
      %s259 = ssub.s32 %s15, 1
      // Predicated region
      $region13: #{attention_forward.1} parent=11 // pred_check
        %p260 = pneg %p62
      $region14: #{attention_forward.1} parent=11 // pred_check_branch
        %262 = sbr.rel (%p260) target = $region16
      $region15: #{attention_forward.1} parent=11 // pred_region
        _
      $region16: #{attention_forward.1} parent=11 // pred_fallthru
        _
      // Predicated region
      $region17: #{attention_forward.1} parent=11 // pred_check
        %p263 = pneg %p83
      $region18: #{attention_forward.1} parent=11 // pred_check_branch
        %265 = sbr.rel (%p263) target = $region20
      $region19: #{attention_forward.1} parent=11 // pred_region
        _
      $region20: #{attention_forward.1} parent=11 // pred_fallthru
        _
      // Predicated region
      $region21: #{attention_forward.1} parent=11 // pred_check
        %p266 = pneg %p156
      $region22: #{attention_forward.1} parent=11 // pred_check_branch
        %268 = sbr.rel (%p266) target = $region24
      $region23: #{attention_forward.1} parent=11 // pred_region
        _
      $region24: #{attention_forward.1} parent=11 // pred_fallthru
        _
      // Predicated region
      $region25: #{attention_forward.1} parent=11 // pred_check
        %p269 = pneg %p177
      $region26: #{attention_forward.1} parent=11 // pred_check_branch
        %271 = sbr.rel (%p269) target = $region28
      $region27: #{attention_forward.1} parent=11 // pred_region
        _
      $region28: #{attention_forward.1} parent=11 // pred_fallthru
        _
      // Predicated region
      $region29: #{attention_forward.1} parent=11 // pred_check
        %p272 = pneg %p198
      $region30: #{attention_forward.1} parent=11 // pred_check_branch
        %274 = sbr.rel (%p272) target = $region32
      $region31: #{attention_forward.1} parent=11 // pred_region
        _
      $region32: #{attention_forward.1} parent=11 // pred_fallthru
        _
      // Predicated region
      $region33: #{attention_forward.1} parent=11 // pred_check
        %p275 = pneg %p219
      $region34: #{attention_forward.1} parent=11 // pred_check_branch
        %277 = sbr.rel (%p275) target = $region36
      $region35: #{attention_forward.1} parent=11 // pred_region
        _
      $region36: #{attention_forward.1} parent=11 // pred_fallthru
        _
    $region12: #{attention_forward.1} parent=5 // pred_fallthru
      _
    %p278 = scmp.lt.s32.totalorder %s15, 2
    // Predicated region
    $region37: #{attention_forward.1} parent=5 // pred_check
      %p279 = pneg %p278
    $region38: #{attention_forward.1} parent=5 // pred_check_branch
      %281 = sbr.rel (%p279) target = $region40
    $region39: #{attention_forward.1} parent=5 // pred_region
      // Predicated region
      $region41: #{attention_forward.1} parent=39 // pred_check
        %p282 = pneg %p35
      $region42: #{attention_forward.1} parent=39 // pred_check_branch
        %284 = sbr.rel (%p282) target = $region44
      $region43: #{attention_forward.1} parent=39 // pred_region
        %p285 = scmp.lt.s32.totalorder %s15, 1
        %s286 = scalar_select %p285, %s15, 1
        %s287 = smul.addr %s286, 5
        %s288 = smul.addr %s287, 8
        %s289 = scalar_lea.vmem %s0, %s288
      $region44: #{attention_forward.1} parent=39 // pred_fallthru
        _
      // Predicated region
      $region45: #{attention_forward.1} parent=39 // pred_check
        %p290 = pneg %p103
      $region46: #{attention_forward.1} parent=39 // pred_check_branch
        %292 = sbr.rel (%p290) target = $region48
      $region47: #{attention_forward.1} parent=39 // pred_region
        %p293 = scmp.lt.s32.totalorder %s15, 1
        %s294 = scalar_select %p293, %s15, 1
        %s295 = smul.addr %s294, 2
        %s296 = smul.addr %s295, 8
        %s297 = scalar_lea.vmem %s3, %s296
      $region48: #{attention_forward.1} parent=39 // pred_fallthru
        _
      // Predicated region
      $region49: #{attention_forward.1} parent=39 // pred_check
        %p298 = pneg %p129
      $region50: #{attention_forward.1} parent=39 // pred_check_branch
        %300 = sbr.rel (%p298) target = $region52
      $region51: #{attention_forward.1} parent=39 // pred_region
        %p301 = scmp.lt.s32.totalorder %s15, 1
        %s302 = scalar_select %p301, %s15, 1
        %s303 = smul.addr %s302, 2
        %s304 = smul.addr %s303, 8
        %s305 = scalar_lea.vmem %s4, %s304
      $region52: #{attention_forward.1} parent=39 // pred_fallthru
        _
    $region40: #{attention_forward.1} parent=5 // pred_fallthru
      _
    %p306 = scmp.le.s32.totalorder 1, %s15
    %p307 = scmp.lt.s32.totalorder %s15, 3
    %p308 = pnand %p306, %p307
    %p309 = pneg %p308
    // Predicated region
    $region53: #{attention_forward.1} parent=5 // pred_check
      _
    $region54: #{attention_forward.1} parent=5 // pred_check_branch
      %311 = sbr.rel (%p308) target = $region56
    $region55: #{attention_forward.1} parent=5 // pred_region
      %s312 = ssub.s32 %s15, 1
      %p313 = scmp.lt.s32.totalorder %s20, 1
      %s314 = scalar_select %p313, %s20, 1
      %s315 = smul.addr %s314, 5
      %s316 = smul.addr %s315, 8
      %s317 = scalar_lea.vmem %s0, %s316
      %p318 = pneg %p41
      %p319 = pneg %p38
      %p320 = pneg %p62
      %p321 = pneg %p59
      %p322 = pneg %p83
      %p323 = pneg %p80
      %p324 = scmp.lt.s32.totalorder %s20, 1
      %s325 = scalar_select %p324, %s20, 1
      %s326 = smul.addr %s325, 2
      %s327 = smul.addr %s326, 8
      %s328 = scalar_lea.vmem %s3, %s327
      %p329 = pneg %p109
      %p330 = pneg %p106
      %p331 = scmp.lt.s32.totalorder %s20, 1
      %s332 = scalar_select %p331, %s20, 1
      %s333 = smul.addr %s332, 2
      %s334 = smul.addr %s333, 8
      %s335 = scalar_lea.vmem %s4, %s334
      %p336 = pneg %p135
      %p337 = pneg %p132
      %p338 = pneg %p156
      %p339 = pneg %p153
      %p340 = pneg %p177
      %p341 = pneg %p174
      %p342 = pneg %p198
      %p343 = pneg %p195
      %p344 = pneg %p219
      %p345 = pneg %p216
      %p346 = pneg %p245
      %p347 = pneg %p242
      %p348 = scmp.lt.s32.totalorder %s20, 1
      %s349 = scalar_select %p348, %s20, 1
      %s350 = smul.addr %s349, 2
      %s351 = smul.addr %s350, 8
      %s352 = scalar_lea.vmem %s9, %s351
      %p353 = scmp.lt.s32.totalorder %s20, 1
      %s354 = scalar_select %p353, %s20, 1
      %s355 = smul.addr %s354, 5
      %s356 = smul.addr %s355, 8
      %s357 = scalar_lea.vmem %s0, %s356
      %p358 = scmp.lt.s32.totalorder %s20, 1
      %s359 = scalar_select %p358, %s20, 1
      %s360 = smul.addr %s359, 2
      %s361 = smul.addr %s360, 8
      %s362 = scalar_lea.vmem %s3, %s361
      %p363 = scmp.lt.s32.totalorder %s20, 1
      %s364 = scalar_select %p363, %s20, 1
      %s365 = smul.addr %s364, 2
      %s366 = smul.addr %s365, 8
      %s367 = scalar_lea.vmem %s4, %s366
      %p368 = scmp.lt.s32.totalorder %s20, 1
      %s369 = scalar_select %p368, %s20, 1
      %s370 = smul.addr %s369, 2
      %s371 = smul.addr %s370, 8
      %s372 = scalar_lea.vmem %s9, %s371
      %v373 = vld [vmem:[%s357] sm:$0xff]
      %v374 = vld [vmem:[%s357 + $0x8] sm:$0xff]
      %v375 = vld [vmem:[%s357 + $0x10] sm:$0xff]
      %v376 = vld [vmem:[%s357 + $0x18] sm:$0xff]
      %v377 = vld [vmem:[%s357 + $0x20] sm:$0xf]
      %v378 = vld [vmem:[%s1] sm:$0xff]
      %v379 = vld [vmem:[%s1 + $0x8] sm:$0xff]
      %v380 = vld [vmem:[%s1 + $0x10] sm:$0xff]
      %v381 = vld [vmem:[%s1 + $0x18] sm:$0xff]
      %v382 = vld [vmem:[%s1 + $0x20] sm:$0xf]
      %v383 = vld [vmem:[%s2] sm:$0xff]
      %v384 = vld [vmem:[%s2 + $0x8] sm:$0xff]
      %v385 = vld [vmem:[%s2 + $0x10] sm:$0xff]
      %v386 = vld [vmem:[%s2 + $0x18] sm:$0xff]
      %v387 = vld [vmem:[%s2 + $0x20] sm:$0xf]
      %389 = vset.pattern.permute.xlu0 0
      %390 = vperm.xlu0 %389, %v383
      %v391 = vpop.permute.xlu0 %390
      %394 = vset.pattern.permute.xlu0 0
      %395 = vperm.xlu0 %394, %v384
      %v396 = vpop.permute.xlu0 %395
      %399 = vset.pattern.permute.xlu0 0
      %400 = vperm.xlu0 %399, %v385
      %v401 = vpop.permute.xlu0 %400
      %403 = vset.pattern.permute.xlu0 0
      %404 = vperm.xlu0 %403, %v386
      %v405 = vpop.permute.xlu0 %404
      %408 = vset.pattern.permute.xlu0 0
      %409 = vperm.xlu0 %408, %v387
      %v410 = vpop.permute.xlu0 %409
      %vm412 = vcmask 293888
      %v414 = vsel %vm412, %v378, 0
      %v417 = vsel %vm412, %v379, 0
      %v420 = vsel %vm412, %v380, 0
      %v423 = vsel %vm412, %v381, 0
      %v426 = vsel %vm412, %v382, 0
      %vm428 = vcmask 1043456
      %v430 = vsel %vm428, %v377, 0
      %432 = vmatprep.subr.mxu0 0.0
      %433 = vmatpush1.msra.mxu0 %v373
      %434 = vmatprep.subr.mxu0 0.0
      %435 = vmatpush1.msra.mxu0 %v374
      %436 = vmatprep.subr.mxu0 0.0
      %437 = vmatpush1.msra.mxu0 %v375
      %438 = vmatprep.subr.mxu0 0.0
      %439 = vmatpush1.msra.mxu0 %v376
      %440 = vmatprep.subr.mxu0 0.0
      %441 = vmatpush1.msra.mxu0 %v430
      %442 = vmatprep.subr.mxu0 0.0
      %443 = vmatpush1.msra.mxu0 0.0
      %444 = vmatprep.subr.mxu0 0.0
      %445 = vmatpush1.msra.mxu0 0.0
      %446 = vmatprep.subr.mxu0 0.0
      %447 = vmatpush1.msra.mxu0 0.0
      %448 = vmatprep.subr.mxu0 0.0
      %449 = vmatpush1.msra.mxu0 0.0
      %450 = vmatprep.subr.mxu0 0.0
      %451 = vmatpush1.msra.mxu0 0.0
      %452 = vmatprep.subr.mxu0 0.0
      %453 = vmatpush1.msra.mxu0 0.0
      %454 = vmatprep.subr.mxu0 0.0
      %455 = vmatpush1.msra.mxu0 0.0
      %456 = vmatprep.subr.mxu0 0.0
      %457 = vmatpush1.msra.mxu0 0.0
      %458 = vmatprep.subr.mxu0 0.0
      %459 = vmatpush1.msra.mxu0 0.0
      %460 = vmatprep.subr.mxu0 0.0
      %461 = vmatpush1.msra.mxu0 0.0
      %462 = vmatprep.subr.mxu0 0.0
      %463 = vmatpush1.msra.mxu0 0.0
      %464 = vmatprep.subr.mxu0 0.0
      %465 = vmatpush1.msra.mxu0 0.0
      %466 = vmatprep.subr.mxu0 0.0
      %467 = vmatpush1.msra.mxu0 0.0
      %468 = vmatprep.subr.mxu0 0.0
      %469 = vmatpush1.msra.mxu0 0.0
      %470 = vmatprep.subr.mxu0 0.0
      %471 = vmatpush1.msra.mxu0 0.0
      %472 = vmatprep.subr.mxu0 0.0
      %473 = vmatpush1.msra.mxu0 0.0
      %474 = vmatprep.subr.mxu0 0.0
      %475 = vmatpush1.msra.mxu0 0.0
      %476 = vmatprep.subr.mxu0 0.0
      %477 = vmatpush1.msra.mxu0 0.0
      %478 = vmatprep.subr.mxu0 0.0
      %479 = vmatpush1.msra.mxu0 0.0
      %480 = vmatprep.subr.mxu0 0.0
      %481 = vmatpush1.msra.mxu0 0.0
      %482 = vmatprep.subr.mxu0 0.0
      %483 = vmatpush1.msra.mxu0 0.0
      %484 = vmatprep.subr.mxu0 0.0
      %485 = vmatpush1.msra.mxu0 0.0
      %486 = vmatprep.subr.mxu0 0.0
      %487 = vmatpush1.msra.mxu0 0.0
      %488 = vmatprep.subr.mxu0 0.0
      %489 = vmatpush1.msra.mxu0 0.0
      %490 = vmatprep.subr.mxu0 0.0
      %491 = vmatpush1.msra.mxu0 0.0
      %492 = vmatprep.subr.mxu0 0.0
      %493 = vmatpush1.msra.mxu0 0.0
      %494 = vmatprep.subr.mxu0 0.0
      %495 = vmatpush1.msra.mxu0 0.0
      %496 = vmatprep.mubr.f32.mxu0 0.0
      %497 = vmatmul.mubr.f32.gmra.mrb[0].mxu0 %v414
      %v498 = vpop.f32.mrb[0].mxu0
      %v499 = vadd.f32 %v391, %v498
      %v500 = vpop.f32.mrb[0].mxu0
      %501 = vmatprep.mubr.f32.mxu0 0.0
      %502 = vmatmul.mubr.f32.gmra.mrb[0].mxu0 %v417
      %v503 = vpop.f32.mrb[0].mxu0
      %v504 = vadd.f32 %v396, %v503
      %v505 = vpop.f32.mrb[0].mxu0
      %506 = vmatprep.mubr.f32.mxu0 0.0
      %507 = vmatmul.mubr.f32.gmra.mrb[0].mxu0 %v420
      %v508 = vpop.f32.mrb[0].mxu0
      %v509 = vpop.f32.mrb[0].mxu0
      %510 = vmatprep.mubr.f32.mxu0 0.0
      %511 = vmatmul.mubr.f32.gmra.mrb[0].mxu0 %v423
      %v512 = vpop.f32.mrb[0].mxu0
      %v513 = vadd.f32 %v405, %v512
      %v514 = vpop.f32.mrb[0].mxu0
      %515 = vmatprep.mubr.f32.mxu0 0.0
      %516 = vmatmul.mubr.f32.gmra.mrb[0].mxu0 %v426
      %v517 = vpop.f32.mrb[0].mxu0
      %v518 = vadd.f32 %v410, %v517
      %v519 = vpop.f32.mrb[0].mxu0
      %520 = vdwg.mxu0
      %v521 = vld [vmem:[%s362] sm:$0xff]
      %v522 = vld [vmem:[%s362 + $0x8] sm:$0xf]
      %v523 = vld [vmem:[%s367] sm:$0xff]
      %v524 = vld [vmem:[%s367 + $0x8] sm:$0xf]
      %526 = vset.pattern.permute.xlu0 0
      %527 = vperm.xlu0 %526, %v521
      %v528 = vpop.permute.xlu0 %527
      %531 = vset.pattern.permute.xlu0 0
      %532 = vperm.xlu0 %531, %v522
      %v533 = vpop.permute.xlu0 %532
      %v535 = vmul.f32 %v499, %v528
      %v536 = vmul.f32 %v504, %v533
      %vm537 = vcmask 883712
      %v538 = vsel %vm537, %v535, 0.0
      %vm539 = vcmask 879616
      %v540 = vsel %vm539, %v536, 0.0
      %v541 = vadd.f32 %v538, %v540
      %v542 = vrot.slane %v541, 4
      %v543 = vadd.f32 %v541, %v542
      %v544 = vrot.slane %v543, 2
      %v545 = vadd.f32 %v543, %v544
      %v546 = vrot.slane %v545, 1
      %v547 = vadd.f32 %v545, %v546
      %548 = vset.pattern.permute.xlu0 1
      %549 = vperm.xlu0 %548, %v521
      %v550 = vpop.permute.xlu0 %549
      %552 = vset.pattern.permute.xlu0 1
      %553 = vperm.xlu0 %552, %v522
      %v554 = vpop.permute.xlu0 %553
      %v556 = vmul.f32 %v499, %v550
      %v557 = vmul.f32 %v504, %v554
      %v558 = vsel %vm537, %v556, 0.0
      %v559 = vsel %vm539, %v557, 0.0
      %v560 = vadd.f32 %v558, %v559
      %v561 = vrot.slane %v560, 4
      %v562 = vadd.f32 %v560, %v561
      %v563 = vrot.slane %v562, 2
      %v564 = vadd.f32 %v562, %v563
      %v565 = vrot.slane %v564, 1
      %v566 = vadd.f32 %v564, %v565
      %v567 = vmax.f32 %v547, %v566
      %v568 = vsub.f32 %v547, %v567
      %v569 = vmul.f32 %v568, 1.442695
      %v570 = vpow.pop %v569
      %v571 = vsub.f32 %v566, %v567
      %v572 = vmul.f32 %v571, 1.442695
      %v573 = vpow.pop %v572
      %v574 = vadd.f32 %v570, %v573
      %v575 = vrcp.pop %v574
      %577 = vset.pattern.permute.xlu0 0
      %578 = vperm.xlu0 %577, %v523
      %v579 = vpop.permute.xlu0 %578
      %582 = vset.pattern.permute.xlu0 0
      %583 = vperm.xlu0 %582, %v524
      %v584 = vpop.permute.xlu0 %583
      %v586 = vmul.f32 %v570, %v579
      %v587 = vmul.f32 %v570, %v584
      %588 = vset.pattern.permute.xlu0 1
      %589 = vperm.xlu0 %588, %v523
      %v590 = vpop.permute.xlu0 %589
      %592 = vset.pattern.permute.xlu0 1
      %593 = vperm.xlu0 %592, %v524
      %v594 = vpop.permute.xlu0 %593
      %v596 = vmul.f32 %v573, %v590
      %v597 = vmul.f32 %v573, %v594
      %v598 = vadd.f32 %v586, %v596
      %v599 = vadd.f32 %v587, %v597
      %v600 = vmul.f32 %v598, %v575
      %v601 = vmul.f32 %v599, %v575
      %604 = vrot.lane.b32.xlu0 %v513, 1
      %v605 = vpop.permute.xlu0 %604
      %606 = vrot.lane.b32.xlu0 %v518, 1
      %v607 = vpop.permute.xlu0 %606
      %vm610 = vcmask 7168
      %v611 = vsel %vm610, 0.0, %v605
      %v612 = vsel %vm610, 0.0, %v607
      %vm613 = vcmask 891904
      %v614 = vsel %vm613, %v611, 0.0
      %v615 = vsel %vm613, %v612, 0.0
      %v616 = vrot.slane %v513, 4
      %v617 = vrot.slane %v518, 4
      %v618 = vsel %vm428, %v616, %v617
      %623 = vrot.lane.b32.xlu0 %v614, 126
      %v624 = vpop.permute.xlu0 %623
      %625 = vrot.lane.b32.xlu0 %v615, 126
      %v626 = vpop.permute.xlu0 %625
      %v628 = vsel %vm428, %v615, %v616
      %v629 = vld [vmem:[%s5] sm:$0xff]
      %v630 = vld [vmem:[%s5 + $0x8] sm:$0xf]
      %v631 = vld [vmem:[%s6] sm:$0xff]
      %v632 = vld [vmem:[%s6 + $0x8] sm:$0xf]
      %634 = vset.pattern.permute.xlu0 0
      %635 = vperm.xlu0 %634, %v631
      %v636 = vpop.permute.xlu0 %635
      %639 = vset.pattern.permute.xlu0 0
      %640 = vperm.xlu0 %639, %v632
      %v641 = vpop.permute.xlu0 %640
      %v644 = vsel %vm412, %v629, 0
      %v647 = vsel %vm412, %v630, 0
      %v649 = vsel %vm428, %v626, 0
      %651 = vmatprep.subr.mxu0 0.0
      %652 = vmatpush1.msra.mxu0 %v614
      %653 = vmatprep.subr.mxu0 0.0
      %654 = vmatpush1.msra.mxu0 %v628
      %655 = vmatprep.subr.mxu0 0.0
      %656 = vmatpush1.msra.mxu0 %v618
      %657 = vmatprep.subr.mxu0 0.0
      %658 = vmatpush1.msra.mxu0 %v624
      %659 = vmatprep.subr.mxu0 0.0
      %660 = vmatpush1.msra.mxu0 %v649
      %661 = vmatprep.subr.mxu0 0.0
      %662 = vmatpush1.msra.mxu0 0.0
      %663 = vmatprep.subr.mxu0 0.0
      %664 = vmatpush1.msra.mxu0 0.0
      %665 = vmatprep.subr.mxu0 0.0
      %666 = vmatpush1.msra.mxu0 0.0
      %667 = vmatprep.subr.mxu0 0.0
      %668 = vmatpush1.msra.mxu0 0.0
      %669 = vmatprep.subr.mxu0 0.0
      %670 = vmatpush1.msra.mxu0 0.0
      %671 = vmatprep.subr.mxu0 0.0
      %672 = vmatpush1.msra.mxu0 0.0
      %673 = vmatprep.subr.mxu0 0.0
      %674 = vmatpush1.msra.mxu0 0.0
      %675 = vmatprep.subr.mxu0 0.0
      %676 = vmatpush1.msra.mxu0 0.0
      %677 = vmatprep.subr.mxu0 0.0
      %678 = vmatpush1.msra.mxu0 0.0
      %679 = vmatprep.subr.mxu0 0.0
      %680 = vmatpush1.msra.mxu0 0.0
      %681 = vmatprep.subr.mxu0 0.0
      %682 = vmatpush1.msra.mxu0 0.0
      %683 = vmatprep.subr.mxu0 0.0
      %684 = vmatpush1.msra.mxu0 0.0
      %685 = vmatprep.subr.mxu0 0.0
      %686 = vmatpush1.msra.mxu0 0.0
      %687 = vmatprep.subr.mxu0 0.0
      %688 = vmatpush1.msra.mxu0 0.0
      %689 = vmatprep.subr.mxu0 0.0
      %690 = vmatpush1.msra.mxu0 0.0
      %691 = vmatprep.subr.mxu0 0.0
      %692 = vmatpush1.msra.mxu0 0.0
      %693 = vmatprep.subr.mxu0 0.0
      %694 = vmatpush1.msra.mxu0 0.0
      %695 = vmatprep.subr.mxu0 0.0
      %696 = vmatpush1.msra.mxu0 0.0
      %697 = vmatprep.subr.mxu0 0.0
      %698 = vmatpush1.msra.mxu0 0.0
      %699 = vmatprep.subr.mxu0 0.0
      %700 = vmatpush1.msra.mxu0 0.0
      %701 = vmatprep.subr.mxu0 0.0
      %702 = vmatpush1.msra.mxu0 0.0
      %703 = vmatprep.subr.mxu0 0.0
      %704 = vmatpush1.msra.mxu0 0.0
      %705 = vmatprep.subr.mxu0 0.0
      %706 = vmatpush1.msra.mxu0 0.0
      %707 = vmatprep.subr.mxu0 0.0
      %708 = vmatpush1.msra.mxu0 0.0
      %709 = vmatprep.subr.mxu0 0.0
      %710 = vmatpush1.msra.mxu0 0.0
      %711 = vmatprep.subr.mxu0 0.0
      %712 = vmatpush1.msra.mxu0 0.0
      %713 = vmatprep.subr.mxu0 0.0
      %714 = vmatpush1.msra.mxu0 0.0
      %715 = vmatprep.mubr.f32.mxu0 0.0
      %716 = vmatmul.mubr.f32.gmra.mrb[0].mxu0 %v644
      %v717 = vpop.f32.mrb[0].mxu0
      %v718 = vadd.f32 %v636, %v717
      %v719 = vpop.f32.mrb[0].mxu0
      %720 = vmatprep.mubr.f32.mxu0 0.0
      %721 = vmatmul.mubr.f32.gmra.mrb[0].mxu0 %v647
      %v722 = vpop.f32.mrb[0].mxu0
      %v723 = vadd.f32 %v641, %v722
      %v724 = vpop.f32.mrb[0].mxu0
      %725 = vdwg.mxu0
      %v726 = vadd.f32 %v600, %v718
      %v727 = vadd.f32 %v601, %v723
      %730 = vrot.lane.b32.xlu0 %v726, 1
      %v731 = vpop.permute.xlu0 %730
      %732 = vrot.lane.b32.xlu0 %v727, 1
      %v733 = vpop.permute.xlu0 %732
      %v736 = vsel %vm610, 0.0, %v731
      %v737 = vsel %vm610, 0.0, %v733
      %v738 = vsel %vm613, %v736, 0.0
      %v739 = vsel %vm613, %v737, 0.0
      %v740 = vrot.slane %v726, 4
      %v741 = vrot.slane %v727, 4
      %v742 = vsel %vm428, %v740, %v741
      %747 = vrot.lane.b32.xlu0 %v738, 126
      %v748 = vpop.permute.xlu0 %747
      %749 = vrot.lane.b32.xlu0 %v739, 126
      %v750 = vpop.permute.xlu0 %749
      %v752 = vsel %vm428, %v739, %v740
      %v753 = vld [vmem:[%s7] sm:$0xff]
      %v754 = vld [vmem:[%s7 + $0x8] sm:$0xf]
      %v755 = vld [vmem:[%s8] sm:$0xff]
      %v756 = vld [vmem:[%s8 + $0x8] sm:$0xf]
      %758 = vset.pattern.permute.xlu0 0
      %759 = vperm.xlu0 %758, %v755
      %v760 = vpop.permute.xlu0 %759
      %763 = vset.pattern.permute.xlu0 0
      %764 = vperm.xlu0 %763, %v756
      %v765 = vpop.permute.xlu0 %764
      %v768 = vsel %vm412, %v753, 0
      %v771 = vsel %vm412, %v754, 0
      %v773 = vsel %vm428, %v750, 0
      %775 = vmatprep.subr.mxu0 0.0
      %776 = vmatpush1.msra.mxu0 %v738
      %777 = vmatprep.subr.mxu0 0.0
      %778 = vmatpush1.msra.mxu0 %v752
      %779 = vmatprep.subr.mxu0 0.0
      %780 = vmatpush1.msra.mxu0 %v742
      %781 = vmatprep.subr.mxu0 0.0
      %782 = vmatpush1.msra.mxu0 %v748
      %783 = vmatprep.subr.mxu0 0.0
      %784 = vmatpush1.msra.mxu0 %v773
      %785 = vmatprep.subr.mxu0 0.0
      %786 = vmatpush1.msra.mxu0 0.0
      %787 = vmatprep.subr.mxu0 0.0
      %788 = vmatpush1.msra.mxu0 0.0
      %789 = vmatprep.subr.mxu0 0.0
      %790 = vmatpush1.msra.mxu0 0.0
      %791 = vmatprep.subr.mxu0 0.0
      %792 = vmatpush1.msra.mxu0 0.0
      %793 = vmatprep.subr.mxu0 0.0
      %794 = vmatpush1.msra.mxu0 0.0
      %795 = vmatprep.subr.mxu0 0.0
      %796 = vmatpush1.msra.mxu0 0.0
      %797 = vmatprep.subr.mxu0 0.0
      %798 = vmatpush1.msra.mxu0 0.0
      %799 = vmatprep.subr.mxu0 0.0
      %800 = vmatpush1.msra.mxu0 0.0
      %801 = vmatprep.subr.mxu0 0.0
      %802 = vmatpush1.msra.mxu0 0.0
      %803 = vmatprep.subr.mxu0 0.0
      %804 = vmatpush1.msra.mxu0 0.0
      %805 = vmatprep.subr.mxu0 0.0
      %806 = vmatpush1.msra.mxu0 0.0
      %807 = vmatprep.subr.mxu0 0.0
      %808 = vmatpush1.msra.mxu0 0.0
      %809 = vmatprep.subr.mxu0 0.0
      %810 = vmatpush1.msra.mxu0 0.0
      %811 = vmatprep.subr.mxu0 0.0
      %812 = vmatpush1.msra.mxu0 0.0
      %813 = vmatprep.subr.mxu0 0.0
      %814 = vmatpush1.msra.mxu0 0.0
      %815 = vmatprep.subr.mxu0 0.0
      %816 = vmatpush1.msra.mxu0 0.0
      %817 = vmatprep.subr.mxu0 0.0
      %818 = vmatpush1.msra.mxu0 0.0
      %819 = vmatprep.subr.mxu0 0.0
      %820 = vmatpush1.msra.mxu0 0.0
      %821 = vmatprep.subr.mxu0 0.0
      %822 = vmatpush1.msra.mxu0 0.0
      %823 = vmatprep.subr.mxu0 0.0
      %824 = vmatpush1.msra.mxu0 0.0
      %825 = vmatprep.subr.mxu0 0.0
      %826 = vmatpush1.msra.mxu0 0.0
      %827 = vmatprep.subr.mxu0 0.0
      %828 = vmatpush1.msra.mxu0 0.0
      %829 = vmatprep.subr.mxu0 0.0
      %830 = vmatpush1.msra.mxu0 0.0
      %831 = vmatprep.subr.mxu0 0.0
      %832 = vmatpush1.msra.mxu0 0.0
      %833 = vmatprep.subr.mxu0 0.0
      %834 = vmatpush1.msra.mxu0 0.0
      %835 = vmatprep.subr.mxu0 0.0
      %836 = vmatpush1.msra.mxu0 0.0
      %837 = vmatprep.subr.mxu0 0.0
      %838 = vmatpush1.msra.mxu0 0.0
      %839 = vmatprep.mubr.f32.mxu0 0.0
      %840 = vmatmul.mubr.f32.gmra.mrb[0].mxu0 %v768
      %v841 = vpop.f32.mrb[0].mxu0
      %v842 = vadd.f32 %v760, %v841
      %v843 = vpop.f32.mrb[0].mxu0
      %844 = vmatprep.mubr.f32.mxu0 0.0
      %845 = vmatmul.mubr.f32.gmra.mrb[0].mxu0 %v771
      %v846 = vpop.f32.mrb[0].mxu0
      %v847 = vadd.f32 %v765, %v846
      %v848 = vpop.f32.mrb[0].mxu0
      %849 = vdwg.mxu0
      %850 = vst.msk [vmem:[%s372] sm:$0xff] %vm537, %v842
      %851 = vst.msk [vmem:[%s372 + $0x8] sm:$0xf] %vm539, %v847
      %p852 = scmp.lt.s32.totalorder %s20, 1
      %s853 = scalar_select %p852, %s20, 1
      %s854 = smul.addr %s853, 2
      %s855 = smul.addr %s854, 8
      %s856 = scalar_lea.vmem %s9, %s855
      // Predicated region
      $region57: #{attention_forward.1} parent=55 // pred_check
        %p857 = pneg %p242
      $region58: #{attention_forward.1} parent=55 // pred_check_branch
        %859 = sbr.rel (%p857) target = $region60
      $region59: #{attention_forward.1} parent=55 // pred_region
        _
      $region60: #{attention_forward.1} parent=55 // pred_fallthru
        _
    $region56: #{attention_forward.1} parent=5 // pred_fallthru
      _
    %p860 = scmp.le.s32.totalorder 2, %s15
    // Predicated region
    $region61: #{attention_forward.1} parent=5 // pred_check
      %p861 = pneg %p860
    $region62: #{attention_forward.1} parent=5 // pred_check_branch
      %863 = sbr.rel (%p861) target = $region64
    $region63: #{attention_forward.1} parent=5 // pred_region
      %s864 = ssub.s32 %s15, 2
      // Predicated region
      $region65: #{attention_forward.1} parent=63 // pred_check
        %p865 = pneg %p248
      $region66: #{attention_forward.1} parent=63 // pred_check_branch
        %867 = sbr.rel (%p865) target = $region68
      $region67: #{attention_forward.1} parent=63 // pred_region
        %p868 = scmp.lt.s32.totalorder %s21, 1
        %s869 = scalar_select %p868, %s21, 1
        %s870 = smul.addr %s869, 2
        %s871 = smul.addr %s870, 8
        %s872 = scalar_lea.vmem %s9, %s871
      $region68: #{attention_forward.1} parent=63 // pred_fallthru
        _
    $region64: #{attention_forward.1} parent=5 // pred_fallthru
      _
  $region6: #{attention_forward.1} parent=0 // loop_footer
    %s19 = sadd.s32 1, %s15
  $region7: #{attention_forward.1} parent=0 // loop_footer_branch
    %14 = sbr.rel target = $region3
  $region8: #{attention_forward.1} parent=0 // loop_exit
    _

</llo_original>
